<compile_context>
chip_gen: v7x
topology: tpu7x:2x2x1
jax: 0.10.0
libtpu: 0.0.40
codegen_flags: <defaults>
</compile_context>

<pallas_src>
import functools

import jax
import jax.numpy as jnp
from jax import lax
from jax.experimental import pallas as pl
from jax.experimental.pallas import tpu as pltpu


def _round_up(x, m):
    return ((x + m - 1) // m) * m


def _tv_kernel(x_ref, out_ref, acc_ref, *, tr, w, h, bh, t_chunk, n_tiles,
               mask_from, s1, s2, compute_dtype):
    c = pl.program_id(0)           # chunk (megacore-parallel)
    j = pl.program_id(1)           # row-tile within chunk (sequential)
    t = c * t_chunk + j            # global row-tile index (may be a phantom)

    @pl.when(j == 0)
    def _():
        acc_ref[...] = jnp.zeros_like(acc_ref)

    x = x_ref[...].astype(compute_dtype)        # native-dtype DMA, cast here

    # Shifted copies via XLU rolls (positive axes!).  Wrapped rows/columns are
    # removed by the masks below.
    xl = pltpu.roll(x, w - 1, axis=1)           # x[r, c+1]
    xu = pltpu.roll(x, tr - 1, axis=0)          # x[r+1, c]
    xlu = pltpu.roll(xl, tr - 1, axis=0)        # x[r+1, c+1]

    d1 = jnp.abs(x - xl)                        # horizontal
    d2 = jnp.abs(x - xu)                        # vertical
    d34 = jnp.abs(x - xlu) + jnp.abs(xu - xl)   # diagonal + anti-diagonal

    lr = lax.broadcasted_iota(jnp.int32, (tr, 1), 0)    # local row
    lc = lax.broadcasted_iota(jnp.int32, (1, w), 1)     # column
    gr = t * tr + lr                                    # folded global row
    col_ok = lc < (w - 1)                               # has right neighbour
    # has a vertical neighbour inside this tile and inside the same image
    row_nb = jnp.logical_and(lr < (tr - 1), (gr % h) < (h - 1))

    # Relative scales only; the common factor 1/(4*B*(H-1)*(W-1)) is applied
    # once on the final scalar in the wrapper.
    part = (jnp.where(col_ok, d1 * s1 + jnp.where(row_nb, d34, 0), 0)
            + jnp.where(row_nb, d2 * s2, 0))

    def group_sum(p):
        # (tr, W) -> (8, W) f32 partial sums: pure vreg-wise VALU adds over
        # sublane groups, no cross-lane/XLU work in the steady-state loop.
        return p.astype(jnp.float32).reshape(tr // 8, 8, w).sum(axis=0)

    if mask_from is None:
        # Every step of every chunk is a full, valid tile: no row select.
        acc_ref[...] += group_sum(part)
    else:
        @pl.when(t < mask_from)
        def _():
            acc_ref[...] += group_sum(part)

        @pl.when(t >= mask_from)
        def _():
            # Tail / phantom steps only: zero padded or out-of-range rows so
            # stale VMEM can never poison the sum.
            acc_ref[...] += group_sum(jnp.where(gr < bh, part, 0))

    @pl.when(j == t_chunk - 1)
    def _():
        out_ref[...] = jnp.sum(acc_ref[...]).reshape(1, 1, 1)


def tv_loss(x, *, tile_rows=None, target_tile_bytes=1 << 20,
            compute_dtype=None):
    """Pallas implementation of TVLoss.forward for x of shape (B, H, W)."""
    B, H, W = x.shape
    if H < 2 or W < 2:
        # TODO(synk): torch yields NaN here (mean of an empty tensor); we fail
        # loudly instead of silently dividing by zero.
        raise ValueError("TVLoss needs H >= 2 and W >= 2.")

    if compute_dtype is None:
        compute_dtype = jnp.bfloat16 if x.dtype == jnp.bfloat16 else jnp.float32
    compute_dtype = jnp.dtype(compute_dtype)

    BH = B * H
    xf = x.reshape(BH, W)                   # fold batch into rows, no copy
    itemsize = xf.dtype.itemsize

    if tile_rows is None:
        tr = (target_tile_bytes // (W * itemsize)) // 8 * 8
        tr = max(8, min(tr, 4096, _round_up(BH, 8)))
    else:
        tr = tile_rows
    assert tr % 8 == 0 and tr >= 8, "tile_rows must be a positive multiple of 8"

    n_tiles = -(-BH // tr)
    n_chunks = 2 if n_tiles >= 2 else 1     # use both TCs on v7x when possible
    t_chunk = -(-n_tiles // n_chunks)

    if BH % tr != 0:
        mask_from = n_tiles - 1             # partial tail tile (+ any phantom)
    elif n_chunks * t_chunk != n_tiles:
        mask_from = n_tiles                 # only the phantom step needs masking
    else:
        mask_from = None                    # every step is a full, valid tile

    # Per-term scales.  s1/s2 are the relative factors folded into the kernel;
    # r2/r34 are the absolute ones used for the seam rows and the final scale.
    s1 = (H - 1) / H                        # horizontal   (r1 / r34)
    s2 = (W - 1) / W                        # vertical     (r2 / r34)
    r2 = 1.0 / (4.0 * B * (H - 1) * W)
    r34 = 1.0 / (4.0 * B * (H - 1) * (W - 1))

    def main_map(c, j):
        # Phantom tail steps (odd n_tiles split over 2 chunks) are clamped to
        # a real tile; their contribution is zeroed inside the kernel.
        return (jnp.minimum(c * t_chunk + j, n_tiles - 1), 0)

    kernel = functools.partial(
        _tv_kernel, tr=tr, w=W, h=H, bh=BH, t_chunk=t_chunk, n_tiles=n_tiles,
        mask_from=mask_from, s1=s1, s2=s2, compute_dtype=compute_dtype)

    tile_bytes = tr * W * itemsize
    # Cap below v7x's 64 MiB physical VMEM; plenty on v5e/v6e (128 MiB).
    vmem_limit = int(min(48 * 1024 * 1024,
                         max(24 * 1024 * 1024, 12 * tile_bytes)))

    chunk_sums = pl.pallas_call(
        kernel,
        out_shape=jax.ShapeDtypeStruct((n_chunks, 1, 1), jnp.float32),
        grid_spec=pltpu.PrefetchScalarGridSpec(
            num_scalar_prefetch=0,
            grid=(n_chunks, t_chunk),
            in_specs=[pl.BlockSpec((tr, W), main_map)],     # streamed row tile
            out_specs=pl.BlockSpec((1, 1, 1), lambda c, j: (c, 0, 0)),
            scratch_shapes=[pltpu.VMEM((8, W), jnp.float32)],
        ),
        compiler_params=pltpu.CompilerParams(
            dimension_semantics=("parallel", "arbitrary"),
            vmem_limit_bytes=vmem_limit,
        ),
    )(xf)

    loss = jnp.sum(chunk_sums) * r34

    # Inter-tile seam rows (row pairs straddling a tile boundary): a handful of
    # rows gathered once here instead of an 8-row halo DMA on every grid step.
    seam_rows = [t * tr - 1 for t in range(1, n_tiles)]
    if seam_rows:
        idx_a = jnp.asarray(seam_rows, dtype=jnp.int32)
        a = xf[idx_a, :].astype(jnp.float32)        # last row of tile t-1
        b = xf[idx_a + 1, :].astype(jnp.float32)    # first row of tile t
        ok = jnp.asarray([(r % H) < (H - 1) for r in seam_rows])[:, None]
        vert = jnp.sum(jnp.where(ok, jnp.abs(a - b), 0.0))
        diag = jnp.sum(jnp.where(ok, jnp.abs(a[:, :-1] - b[:, 1:]), 0.0))
        anti = jnp.sum(jnp.where(ok, jnp.abs(b[:, :-1] - a[:, 1:]), 0.0))
        loss = loss + vert * r2 + (diag + anti) * r34

    return loss


def tv_loss_ref(x):
    """Pure-JAX reference mirroring the PyTorch module (f32 math)."""
    x = x.astype(jnp.float32)
    L1 = jnp.mean(jnp.abs(x[:, :, :-1] - x[:, :, 1:]))
    L2 = jnp.mean(jnp.abs(x[:, :-1, :] - x[:, 1:, :]))
    L3 = jnp.mean(jnp.abs(x[:, :-1, :-1] - x[:, 1:, 1:]))
    L4 = jnp.mean(jnp.abs(x[:, 1:, :-1] - x[:, :-1, 1:]))
    return (L1 + L2 + L3 + L4) / 4.0


if __name__ == "__main__":
    key = jax.random.PRNGKey(0)
    k1, k2, k3 = jax.random.split(key, 3)

    # Small case matching the module's 3-D (B, H, W) indexing (single tile).
    x1 = jax.random.normal(k1, (2, 16, 16), dtype=jnp.float32)
    out1 = jax.block_until_ready(tv_loss(x1))
    ref1 = jax.block_until_ready(tv_loss_ref(x1))
    assert jnp.allclose(out1, ref1, rtol=1e-4, atol=1e-6), (out1, ref1)

    # Row tiling, tile seams (incl. one at an image boundary), a partial tail
    # tile, non-128-multiple W, and both grid chunks — f32 path.
    x2 = jax.random.normal(k2, (3, 40, 48), dtype=jnp.float32)
    out2 = jax.block_until_ready(tv_loss(x2, tile_rows=16))
    ref2 = jax.block_until_ready(tv_loss_ref(x2))
    assert jnp.allclose(out2, ref2, rtol=1e-4, atol=1e-6), (out2, ref2)

    # bf16 input: native-dtype DMA + bf16 in-kernel math with f32 accumulation;
    # the odd tile count also exercises the masked phantom step on chunk 1.
    x3 = jax.random.normal(k3, (2, 24, 128)).astype(jnp.bfloat16)
    out3 = jax.block_until_ready(tv_loss(x3, tile_rows=16))
    ref3 = jax.block_until_ready(tv_loss_ref(x3))
    assert jnp.allclose(out3, ref3, rtol=2e-2, atol=1e-3), (out3, ref3)

    print("KERNEL_OK")
</pallas_src>

<mosaic_0001>
module attributes {stable_mosaic.version = 11 : i64} {
  func.func @_tv_kernel(%arg0: i32, %arg1: i32, %arg2: memref<32x16xf32, #tpu.memory_space<vmem>>, %arg3: memref<1x1x1xf32, #tpu.memory_space<vmem>>, %arg4: memref<8x16xf32, #tpu.memory_space<vmem>>) attributes {dimension_semantics = [#tpu.dimension_semantics<parallel>, #tpu.dimension_semantics<arbitrary>], iteration_bounds = array<i64: 1, 1>, scalar_prefetch = 0 : i64, scratch_operands = 1 : i64, tpu.core_type = #tpu.core_type<tc>, window_params = [{transform_indices = @transform_0, window_bounds = array<i64: 32, 16>}, {transform_indices = @transform_1, window_bounds = array<i64: 1, 1, 1>}]} {
    %c1_i32 = arith.constant 1 : i32
    %0 = arith.muli %arg0, %c1_i32 : i32
    %1 = arith.addi %0, %arg1 : i32
    %c0_i32 = arith.constant 0 : i32
    %2 = arith.cmpi eq, %arg1, %c0_i32 : i32
    %3 = arith.extui %2 : i1 to i32
    %c0_i32_0 = arith.constant 0 : i32
    %4 = arith.cmpi ne, %3, %c0_i32_0 : i32
    scf.if %4 {
      %cst_22 = arith.constant 0.000000e+00 : f32
      %75 = vector.broadcast %cst_22 : f32 to vector<8x16xf32>
      %c0_23 = arith.constant 0 : index
      %c0_24 = arith.constant 0 : index
      %76 = vector.load %arg4[%c0_23, %c0_24] : memref<8x16xf32, #tpu.memory_space<vmem>>, vector<8x16xf32>
      tpu.vector_store %arg4[%c0_23, %c0_24], %75 {strides = array<i32>} : memref<8x16xf32, #tpu.memory_space<vmem>>, vector<8x16xf32>,
    } else {
    }
    %c0 = arith.constant 0 : index
    %c0_1 = arith.constant 0 : index
    %5 = vector.load %arg2[%c0, %c0_1] : memref<32x16xf32, #tpu.memory_space<vmem>>, vector<32x16xf32>
    %c15_i32 = arith.constant 15 : i32
    %6 = tpu.dynamic_rotate %5 by %c15_i32 dim 1 : vector<32x16xf32>, i32 -> vector<32x16xf32>
    %c31_i32 = arith.constant 31 : i32
    %7 = tpu.dynamic_rotate %5 by %c31_i32 dim 0 : vector<32x16xf32>, i32 -> vector<32x16xf32>
    %c31_i32_2 = arith.constant 31 : i32
    %8 = tpu.dynamic_rotate %6 by %c31_i32_2 dim 0 : vector<32x16xf32>, i32 -> vector<32x16xf32>
    %9 = arith.subf %5, %6 : vector<32x16xf32>
    %10 = math.absf %9 : vector<32x16xf32>
    %11 = arith.subf %5, %7 : vector<32x16xf32>
    %12 = math.absf %11 : vector<32x16xf32>
    %13 = arith.subf %5, %8 : vector<32x16xf32>
    %14 = math.absf %13 : vector<32x16xf32>
    %15 = arith.subf %7, %6 : vector<32x16xf32>
    %16 = math.absf %15 : vector<32x16xf32>
    %17 = arith.addf %14, %16 : vector<32x16xf32>
    %18 = tpu.iota {dimensions = array<i32: 0>} : vector<32x1xi32>
    %19 = tpu.iota {dimensions = array<i32: 1>} : vector<1x16xi32>
    %c32_i32 = arith.constant 32 : i32
    %20 = arith.muli %1, %c32_i32 : i32
    %21 = vector.broadcast %20 : i32 to vector<32x1xi32>
    %22 = arith.addi %21, %18 : vector<32x1xi32>
    %c15_i32_3 = arith.constant 15 : i32
    %23 = vector.broadcast %c15_i32_3 : i32 to vector<1x16xi32>
    %24 = arith.cmpi slt, %19, %23 : vector<1x16xi32>
    %c31_i32_4 = arith.constant 31 : i32
    %25 = vector.broadcast %c31_i32_4 : i32 to vector<32x1xi32>
    %26 = arith.cmpi slt, %18, %25 : vector<32x1xi32>
    %c16_i32 = arith.constant 16 : i32
    %c0_i32_5 = arith.constant 0 : i32
    %27 = arith.cmpi eq, %c16_i32, %c0_i32_5 : i32
    %c1_i32_6 = arith.constant 1 : i32
    %28 = arith.select %27, %c1_i32_6, %c16_i32 : i32
    %29 = vector.broadcast %28 : i32 to vector<32x1xi32>
    %30 = arith.remsi %22, %29 : vector<32x1xi32>
    %c0_i32_7 = arith.constant 0 : i32
    %31 = vector.broadcast %c0_i32_7 : i32 to vector<32x1xi32>
    %32 = arith.cmpi ne, %30, %31 : vector<32x1xi32>
    %c0_i32_8 = arith.constant 0 : i32
    %33 = vector.broadcast %c0_i32_8 : i32 to vector<32x1xi32>
    %34 = arith.cmpi slt, %30, %33 : vector<32x1xi32>
    %c0_i32_9 = arith.constant 0 : i32
    %35 = arith.cmpi slt, %28, %c0_i32_9 : i32
    %36 = vector.broadcast %35 : i1 to vector<32x1xi1>
    %37 = vector.broadcast %36 : vector<32x1xi1> to vector<32x1xi1>
    %38 = arith.xori %34, %37 : vector<32x1xi1>
    %39 = arith.andi %38, %32 : vector<32x1xi1>
    %40 = vector.broadcast %28 : i32 to vector<32x1xi32>
    %41 = arith.addi %30, %40 : vector<32x1xi32>
    %42 = arith.select %39, %41, %30 : vector<32x1xi1>, vector<32x1xi32>
    %c15_i32_10 = arith.constant 15 : i32
    %43 = vector.broadcast %c15_i32_10 : i32 to vector<32x1xi32>
    %44 = arith.cmpi slt, %42, %43 : vector<32x1xi32>
    %45 = arith.andi %26, %44 : vector<32x1xi1>
    %cst = arith.constant 9.375000e-01 : f32
    %46 = vector.broadcast %cst : f32 to vector<32x16xf32>
    %47 = arith.mulf %10, %46 : vector<32x16xf32>
    %c0_i32_11 = arith.constant 0 : i32
    %48 = arith.sitofp %c0_i32_11 : i32 to f32
    %49 = vector.shape_cast %45 : vector<32x1xi1> to vector<32x1xi1>
    %50 = vector.broadcast %49 : vector<32x1xi1> to vector<32x16xi1>
    %51 = vector.broadcast %48 : f32 to vector<32x16xf32>
    %52 = arith.select %50, %17, %51 : vector<32x16xi1>, vector<32x16xf32>
    %53 = arith.addf %47, %52 : vector<32x16xf32>
    %c0_i32_12 = arith.constant 0 : i32
    %54 = arith.sitofp %c0_i32_12 : i32 to f32
    %55 = vector.shape_cast %24 : vector<1x16xi1> to vector<1x16xi1>
    %56 = vector.broadcast %55 : vector<1x16xi1> to vector<32x16xi1>
    %57 = vector.broadcast %54 : f32 to vector<32x16xf32>
    %58 = arith.select %56, %53, %57 : vector<32x16xi1>, vector<32x16xf32>
    %cst_13 = arith.constant 9.375000e-01 : f32
    %59 = vector.broadcast %cst_13 : f32 to vector<32x16xf32>
    %60 = arith.mulf %12, %59 : vector<32x16xf32>
    %c0_i32_14 = arith.constant 0 : i32
    %61 = arith.sitofp %c0_i32_14 : i32 to f32
    %62 = vector.shape_cast %45 : vector<32x1xi1> to vector<32x1xi1>
    %63 = vector.broadcast %62 : vector<32x1xi1> to vector<32x16xi1>
    %64 = vector.broadcast %61 : f32 to vector<32x16xf32>
    %65 = arith.select %63, %60, %64 : vector<32x16xi1>, vector<32x16xf32>
    %66 = arith.addf %58, %65 : vector<32x16xf32>
    %c0_15 = arith.constant 0 : index
    %c0_16 = arith.constant 0 : index
    %67 = vector.load %arg4[%c0_15, %c0_16] : memref<8x16xf32, #tpu.memory_space<vmem>>, vector<8x16xf32>
    %68 = vector.shape_cast %66 : vector<32x16xf32> to vector<4x8x16xf32>
    %cst_17 = arith.constant dense<0.000000e+00> : vector<8x16xf32>
    %69 = vector.multi_reduction <add>, %68, %cst_17 [0] : vector<4x8x16xf32> to vector<8x16xf32>
    %70 = arith.addf %67, %69 : vector<8x16xf32>
    %c0_18 = arith.constant 0 : index
    %c0_19 = arith.constant 0 : index
    %71 = vector.load %arg4[%c0_18, %c0_19] : memref<8x16xf32, #tpu.memory_space<vmem>>, vector<8x16xf32>
    tpu.vector_store %arg4[%c0_18, %c0_19], %70 {strides = array<i32>} : memref<8x16xf32, #tpu.memory_space<vmem>>, vector<8x16xf32>,
    %c0_i32_20 = arith.constant 0 : i32
    %72 = arith.cmpi eq, %arg1, %c0_i32_20 : i32
    %73 = arith.extui %72 : i1 to i32
    %c0_i32_21 = arith.constant 0 : i32
    %74 = arith.cmpi ne, %73, %c0_i32_21 : i32
    scf.if %74 {
      %c0_22 = arith.constant 0 : index
      %c0_23 = arith.constant 0 : index
      %75 = vector.load %arg4[%c0_22, %c0_23] : memref<8x16xf32, #tpu.memory_space<vmem>>, vector<8x16xf32>
      %76 = vector.shape_cast %75 : vector<8x16xf32> to vector<1x8x16xf32>
      %cst_24 = arith.constant dense<0.000000e+00> : vector<1xf32>
      %77 = vector.multi_reduction <add>, %76, %cst_24 [1, 2] : vector<1x8x16xf32> to vector<1xf32>
      %78 = vector.shape_cast %77 : vector<1xf32> to vector<1x1x1xf32>
      %79 = vector.extract %78[0, 0, 0] : f32 from vector<1x1x1xf32>
      %80 = vector.broadcast %79 : f32 to vector<1x1x1xf32>
      %c0_25 = arith.constant 0 : index
      %c0_26 = arith.constant 0 : index
      %c0_27 = arith.constant 0 : index
      %81 = vector.load %arg3[%c0_25, %c0_26, %c0_27] : memref<1x1x1xf32, #tpu.memory_space<vmem>>, vector<1x1x1xf32>
      tpu.vector_store %arg3[%c0_25, %c0_26, %c0_27], %80 {strides = array<i32>} : memref<1x1x1xf32, #tpu.memory_space<vmem>>, vector<1x1x1xf32>,
    } else {
    }
    return
  }
  func.func @transform_0(%arg0: i32, %arg1: i32) -> (i32, i32) {
    %c1_i32 = arith.constant 1 : i32
    %0 = arith.muli %arg0, %c1_i32 : i32
    %1 = arith.addi %0, %arg1 : i32
    %c0_i32 = arith.constant 0 : i32
    %2 = arith.minsi %1, %c0_i32 : i32
    %c0_i32_0 = arith.constant 0 : i32
    %c0_i32_1 = arith.constant 0 : i32
    return %2, %c0_i32_0 : i32, i32
  }
  func.func @transform_1(%arg0: i32, %arg1: i32) -> (i32, i32, i32) {
    %c0_i32 = arith.constant 0 : i32
    %c0_i32_0 = arith.constant 0 : i32
    %c0_i32_1 = arith.constant 0 : i32
    return %arg0, %c0_i32, %c0_i32_0 : i32, i32, i32
  }
}

</mosaic_0001>

<llo_original>
// kernel: tpu_custom_call.1
$region0: #{tpu_custom_call.1}
  #allocation0 [shape = 'u32[]', space=smem, size = 0x4, offset = 0x4, fixed_abs, tag = 'smem constant byte address 0x4 - core index']
  #allocation1 [shape = 'u32[144,128]{1,0:T(1,128)}', space=vmem, size = 0x12000, scoped, tag = 'internal scratch']
  #allocation2 [shape = 'f32[8,16]{1,0:T(8,128)}', space=vmem, size = 0x1000, scoped, tag = 'scratch operand']
  %s0 = inlined_call_operand.vmem [shape: f32[32,16], index: 0, kind: input, shape index: {}]
  %s1 = inlined_call_operand.hbm [shape: f32[1,1,1], index: 1, kind: output, shape index: {}]
  %s2 = sld [smem:[#allocation0]]
  $region22: #{tpu_custom_call.1} parent=0
    _
  %s4 = ssub.s32 1, %s2
  %s5 = scalar_select 0, %s4, %s2
  $region1: #{tpu_custom_call.1} parent=0
    #allocation3 [shape = 'u8[512]{0}', space=vmem, size = 0x400, scoped, tag = 'output window, operand 0, single buffered']
    #allocation4 [shape = 's32[1]{0}', space=sflag, size = 0x4, scoped, tag = 'scoped memory for tpu_custom_call.1']
    %6 = vsyncpa [#allocation4], 0
    // Predicated region
    $region2: #{tpu_custom_call.1} parent=1 // pred_check
      _
    $region3: #{tpu_custom_call.1} parent=1 // pred_check_branch
      %8 = sbr.rel (0) target = $region5
    $region4: #{tpu_custom_call.1} parent=1 // pred_region
      %s9 = sadd.s32 0, 0
      %p10 = scmp.lt.s32.totalorder %s9, 0
      %s11 = scalar_select %p10, %s9, 0
      %s12 = smul.u32 4, %s11
      %p13 = scmp.lt.s32.totalorder %s12, 3
      %s14 = scalar_select %p13, %s12, 3
      %s15 = smul.addr %s14, 8
      %s16 = scalar_lea.vmem %s0, %s15
      %s17 = sadd.s32 0, 0
      %p18 = scmp.lt.s32.totalorder %s17, 0
      %s19 = scalar_select %p18, %s17, 0
      %s20 = smul.u32 4, %s19
    $region5: #{tpu_custom_call.1} parent=1 // pred_fallthru
      _
    %s21 = sadd.s32 0, 0
    %p22 = scmp.lt.s32.totalorder %s21, 0
    %s23 = scalar_select %p22, %s21, 0
    %s24 = smul.u32 4, %s23
    %p25 = scmp.lt.s32.totalorder %s24, 3
    %s26 = scalar_select %p25, %s24, 3
    %s27 = smul.addr %s26, 8
    %s28 = scalar_lea.vmem %s0, %s27
    %s29 = sadd.s32 0, 0
    %p30 = scmp.lt.s32.totalorder %s29, 0
    %s31 = scalar_select %p30, %s29, 0
    %s32 = smul.u32 4, %s31
    %p33 = scmp.lt.s32.totalorder %s32, 3
    %s34 = scalar_select %p33, %s32, 3
    %s35 = smul.addr %s34, 8
    %s36 = scalar_lea.vmem %s0, %s35
    %s37 = sadd.s32 0, 0
    %p38 = scmp.lt.s32.totalorder %s37, 0
    %s39 = scalar_select %p38, %s37, 0
    %s40 = smul.u32 4, %s39
    %s41 = sadd.s32 0, 0
    %p42 = scmp.eq.s32.totalorder 0, 0
    // Predicated region
    $region6: #{tpu_custom_call.1} parent=1 // pred_check
      %p43 = pneg %p42
    $region7: #{tpu_custom_call.1} parent=1 // pred_check_branch
      %45 = sbr.rel (%p43) target = $region9
    $region8: #{tpu_custom_call.1} parent=1 // pred_region
      %vm46 = vcmask 130048
      %47 = vst.msk [vmem:[#allocation2] sm:$0xff] %vm46, 0.0
    $region9: #{tpu_custom_call.1} parent=1 // pred_fallthru
      _
    %v48 = vld [vmem:[%s36] sm:$0xff]
    %v49 = vld [vmem:[%s36 + $0x8] sm:$0xff]
    %v50 = vld [vmem:[%s36 + $0x10] sm:$0xff]
    %v51 = vld [vmem:[%s36 + $0x18] sm:$0xff]
    %vm52 = vcmask 1047680
    %53 = vrot.lane.b32.xlu0 %v48, 16
    %v54 = vpop.permute.xlu0 %53
    %v55 = vsel %vm52, %v54, %v48
    %56 = vrot.lane.b32.xlu0 %v49, 16
    %v57 = vpop.permute.xlu0 %56
    %v58 = vsel %vm52, %v57, %v49
    %59 = vrot.lane.b32.xlu0 %v50, 16
    %v60 = vpop.permute.xlu0 %59
    %v61 = vsel %vm52, %v60, %v50
    %62 = vrot.lane.b32.xlu0 %v51, 16
    %v63 = vpop.permute.xlu0 %62
    %v64 = vsel %vm52, %v63, %v51
    %65 = vrot.lane.b32.xlu0 %v55, 16
    %v66 = vpop.permute.xlu0 %65
    %67 = vrot.lane.b32.xlu0 %v58, 16
    %v68 = vpop.permute.xlu0 %67
    %69 = vrot.lane.b32.xlu0 %v61, 16
    %v70 = vpop.permute.xlu0 %69
    %71 = vrot.lane.b32.xlu0 %v64, 16
    %v72 = vpop.permute.xlu0 %71
    %v73 = vsel %vm52, %v66, %v48
    %v74 = vsel %vm52, %v68, %v49
    %v75 = vsel %vm52, %v70, %v50
    %v76 = vsel %vm52, %v72, %v51
    %v77 = vrot.slane %v48, 1
    %v78 = vrot.slane %v49, 1
    %v79 = vrot.slane %v50, 1
    %v80 = vrot.slane %v51, 1
    %v81 = vlaneseq
    %v82 = vshrl.u32 %v81, 7
    %vm83 = vcmp.lt.s32.totalorder %v82, 7
    %v84 = vsel %vm83, %v79, %v80
    %v85 = vsel %vm83, %v78, %v79
    %v86 = vsel %vm83, %v77, %v78
    %v87 = vsel %vm83, %v80, %v77
    %92 = vrot.lane.b32.xlu0 %v73, 127
    %v93 = vpop.permute.xlu0 %92
    %94 = vrot.lane.b32.xlu0 %v74, 127
    %v95 = vpop.permute.xlu0 %94
    %96 = vrot.lane.b32.xlu0 %v75, 127
    %v97 = vpop.permute.xlu0 %96
    %98 = vrot.lane.b32.xlu0 %v76, 127
    %v99 = vpop.permute.xlu0 %98
    %v104 = vrot.slane %v93, 1
    %v105 = vrot.slane %v95, 1
    %v106 = vrot.slane %v97, 1
    %v107 = vrot.slane %v99, 1
    %v108 = vsel %vm83, %v106, %v107
    %v109 = vsel %vm83, %v105, %v106
    %v110 = vsel %vm83, %v104, %v105
    %v111 = vsel %vm83, %v107, %v104
    %v112 = vsub.f32 %v48, %v93
    %v113 = vsub.f32 %v49, %v95
    %v114 = vsub.f32 %v50, %v97
    %v115 = vsub.f32 %v51, %v99
    %v116 = vand.u32 2147483647, %v112
    %v117 = vand.u32 2147483647, %v113
    %v118 = vand.u32 2147483647, %v114
    %v119 = vand.u32 2147483647, %v115
    %v120 = vsub.f32 %v48, %v86
    %v121 = vsub.f32 %v49, %v85
    %v122 = vsub.f32 %v50, %v84
    %v123 = vsub.f32 %v51, %v87
    %v124 = vand.u32 2147483647, %v120
    %v125 = vand.u32 2147483647, %v121
    %v126 = vand.u32 2147483647, %v122
    %v127 = vand.u32 2147483647, %v123
    %v128 = vsub.f32 %v48, %v110
    %v129 = vsub.f32 %v49, %v109
    %v130 = vsub.f32 %v50, %v108
    %v131 = vsub.f32 %v51, %v111
    %v132 = vand.u32 2147483647, %v128
    %v133 = vand.u32 2147483647, %v129
    %v134 = vand.u32 2147483647, %v130
    %v135 = vand.u32 2147483647, %v131
    %v136 = vsub.f32 %v86, %v93
    %v137 = vsub.f32 %v85, %v95
    %v138 = vsub.f32 %v84, %v97
    %v139 = vsub.f32 %v87, %v99
    %v140 = vand.u32 2147483647, %v136
    %v141 = vand.u32 2147483647, %v137
    %v142 = vand.u32 2147483647, %v138
    %v143 = vand.u32 2147483647, %v139
    %v144 = vadd.f32 %v132, %v140
    %v145 = vadd.f32 %v133, %v141
    %v146 = vadd.f32 %v134, %v142
    %v147 = vadd.f32 %v135, %v143
    %v148 = vadd.s32 %v82, 8
    %v149 = vadd.s32 %v82, 16
    %v150 = vadd.s32 %v82, 24
    %v151 = vlaneseq
    %v152 = vand.u32 %v151, 127
    %s153 = smul.u32 %s41, 32
    %v154 = vstv %s153
    %v155 = vadd.s32 %v154, %v82
    %v156 = vadd.s32 %v154, %v148
    %v157 = vadd.s32 %v154, %v149
    %v158 = vadd.s32 %v154, %v150
    %vm159 = vcmp.lt.s32.totalorder %v152, 15
    %vm160 = vcmp.lt.s32.totalorder %v82, 31
    %vm161 = vcmp.lt.s32.totalorder %v148, 31
    %vm162 = vcmp.lt.s32.totalorder %v149, 31
    %vm163 = vcmp.lt.s32.totalorder %v150, 31
    %vm164 = vcmp.lt.s32.totalorder %v155, 0
    %v165 = vsub.s32 0, %v155
    %v166 = vsel %vm164, %v165, %v155
    %v167 = vshrl.u32 %v166, 4
    %v168 = vand.u32 %v166, 15
    %v169 = vsub.s32 0, %v168
    %v170 = vsel %vm164, %v169, %v168
    %vm171 = vcmp.lt.s32.totalorder %v156, 0
    %v172 = vsub.s32 0, %v156
    %v173 = vsel %vm171, %v172, %v156
    %v174 = vshrl.u32 %v173, 4
    %v175 = vand.u32 %v173, 15
    %v176 = vsub.s32 0, %v175
    %v177 = vsel %vm171, %v176, %v175
    %vm178 = vcmp.lt.s32.totalorder %v157, 0
    %v179 = vsub.s32 0, %v157
    %v180 = vsel %vm178, %v179, %v157
    %v181 = vshrl.u32 %v180, 4
    %v182 = vand.u32 %v180, 15
    %v183 = vsub.s32 0, %v182
    %v184 = vsel %vm178, %v183, %v182
    %vm185 = vcmp.lt.s32.totalorder %v158, 0
    %v186 = vsub.s32 0, %v158
    %v187 = vsel %vm185, %v186, %v158
    %v188 = vshrl.u32 %v187, 4
    %v189 = vand.u32 %v187, 15
    %v190 = vsub.s32 0, %v189
    %v191 = vsel %vm185, %v190, %v189
    %vm192 = vcmp.ne.s32.totalorder %v170, 0
    %vm193 = vcmp.ne.s32.totalorder %v177, 0
    %vm194 = vcmp.ne.s32.totalorder %v184, 0
    %vm195 = vcmp.ne.s32.totalorder %v191, 0
    %vm196 = vcmp.lt.s32.totalorder %v170, 0
    %vm197 = vcmp.lt.s32.totalorder %v177, 0
    %vm198 = vcmp.lt.s32.totalorder %v184, 0
    %vm199 = vcmp.lt.s32.totalorder %v191, 0
    %vm200 = vmand %vm196, %vm192
    %vm201 = vmand %vm197, %vm193
    %vm202 = vmand %vm198, %vm194
    %vm203 = vmand %vm199, %vm195
    %v204 = vadd.s32 %v170, 16
    %v205 = vadd.s32 %v177, 16
    %v206 = vadd.s32 %v184, 16
    %v207 = vadd.s32 %v191, 16
    %v208 = vsel %vm200, %v204, %v170
    %v209 = vsel %vm201, %v205, %v177
    %v210 = vsel %vm202, %v206, %v184
    %v211 = vsel %vm203, %v207, %v191
    %vm212 = vcmp.lt.s32.totalorder %v208, 15
    %vm213 = vcmp.lt.s32.totalorder %v209, 15
    %vm214 = vcmp.lt.s32.totalorder %v210, 15
    %vm215 = vcmp.lt.s32.totalorder %v211, 15
    %vm216 = vmand %vm160, %vm212
    %vm217 = vmand %vm161, %vm213
    %vm218 = vmand %vm162, %vm214
    %vm219 = vmand %vm163, %vm215
    %v220 = vmul.f32 %v116, 0.9375
    %v221 = vmul.f32 %v117, 0.9375
    %v222 = vmul.f32 %v118, 0.9375
    %v223 = vmul.f32 %v119, 0.9375
    %v224 = vsel %vm216, 1, 0
    %v225 = vsel %vm217, 1, 0
    %v226 = vsel %vm218, 1, 0
    %v227 = vsel %vm219, 1, 0
    %vm228 = vcmp.eq.s32.totalorder %v224, 1
    %vm229 = vcmp.eq.s32.totalorder %v225, 1
    %vm230 = vcmp.eq.s32.totalorder %v226, 1
    %vm231 = vcmp.eq.s32.totalorder %v227, 1
    %v232 = vsel %vm228, %v144, 0.0
    %v233 = vsel %vm229, %v145, 0.0
    %v234 = vsel %vm230, %v146, 0.0
    %v235 = vsel %vm231, %v147, 0.0
    %v236 = vadd.f32 %v220, %v232
    %v237 = vadd.f32 %v221, %v233
    %v238 = vadd.f32 %v222, %v234
    %v239 = vadd.f32 %v223, %v235
    %v240 = vsel %vm159, 1, 0
    %vm241 = vcmp.eq.s32.totalorder %v240, 1
    %v242 = vsel %vm241, %v236, 0.0
    %v243 = vsel %vm241, %v237, 0.0
    %v244 = vsel %vm241, %v238, 0.0
    %v245 = vsel %vm241, %v239, 0.0
    %v246 = vmul.f32 %v124, 0.9375
    %v247 = vmul.f32 %v125, 0.9375
    %v248 = vmul.f32 %v126, 0.9375
    %v249 = vmul.f32 %v127, 0.9375
    %v250 = vsel %vm228, %v246, 0.0
    %v251 = vsel %vm229, %v247, 0.0
    %v252 = vsel %vm230, %v248, 0.0
    %v253 = vsel %vm231, %v249, 0.0
    %v254 = vadd.f32 %v242, %v250
    %v255 = vadd.f32 %v243, %v251
    %v256 = vadd.f32 %v244, %v252
    %v257 = vadd.f32 %v245, %v253
    %v258 = vld [vmem:[#allocation2] sm:$0xff]
    %vm259 = vcmask 130048
    %v260 = vsel %vm259, %v254, 0.0
    %v261 = vsel %vm259, %v255, 0.0
    %v262 = vadd.f32 %v260, %v261
    %v263 = vsel %vm259, %v256, 0.0
    %v264 = vadd.f32 %v262, %v263
    %v265 = vsel %vm259, %v257, 0.0
    %v266 = vadd.f32 %v264, %v265
    %v267 = vadd.f32 %v258, %v266
    %268 = vst.msk [vmem:[#allocation2] sm:$0xff] %vm259, %v267
    // Predicated region
    $region10: #{tpu_custom_call.1} parent=1 // pred_check
      %p269 = pneg %p42
    $region11: #{tpu_custom_call.1} parent=1 // pred_check_branch
      %271 = sbr.rel (%p269) target = $region13
    $region12: #{tpu_custom_call.1} parent=1 // pred_region
      %v272 = vld [vmem:[#allocation2] sm:$0xff]
      %v273 = vsel %vm259, %v272, 0.0
      %274 = vadd.xlane.f32.xlu0 %v273
      %v275 = vpop.xlane.xlu0 %274
      %v276 = vrot.slane %v275, 4
      %v277 = vadd.f32 %v275, %v276
      %v278 = vrot.slane %v277, 2
      %v279 = vadd.f32 %v277, %v278
      %v280 = vrot.slane %v279, 1
      %v281 = vadd.f32 %v279, %v280
      %s282 = vtos %v281
      %v283 = vstv %s282
      %vm284 = vcmask 0
      %285 = vst.msk [vmem:[#allocation3] sm:$0x1] %vm284, %v283
    $region13: #{tpu_custom_call.1} parent=1 // pred_fallthru
      _
    // Predicated region
    $region14: #{tpu_custom_call.1} parent=1 // pred_check
      _
    $region15: #{tpu_custom_call.1} parent=1 // pred_check_branch
      %287 = sbr.rel (0) target = $region17
    $region16: #{tpu_custom_call.1} parent=1 // pred_region
      %s289 = ssub.s32 16, 16
      %290 = vsyncadd [#allocation4], %s289
      %s292 = sshll.u32 [#allocation3], 4
      %s293 = int_to_ptr.vmem [resolvable:$true] %s292
      %295 = dma.vmem_to_hbm [thread:$0]  %s293, 16, %s1, [#allocation4]
    $region17: #{tpu_custom_call.1} parent=1 // pred_fallthru
      _
    // Predicated region
    $region18: #{tpu_custom_call.1} parent=1 // pred_check
      _
    $region19: #{tpu_custom_call.1} parent=1 // pred_check_branch
      %297 = sbr.rel (0) target = $region21
    $region20: #{tpu_custom_call.1} parent=1 // pred_region
      %298 = dma.done [#allocation4], 16
    $region21: #{tpu_custom_call.1} parent=1 // pred_fallthru
      _
    %299 = vsyncpa [#allocation4], 1

</llo_original>
